<compile_context>
chip_gen: v7x
topology: tpu7x:2x2x1
jax: 0.10.0
libtpu: 0.0.40
codegen_flags: <defaults>
</compile_context>

<pallas_src>
import functools

import jax
import jax.numpy as jnp
from jax.experimental import pallas as pl
from jax.experimental.pallas import tpu as pltpu

_TN_MAX = 512  # row-tile cap: ~1.5 MiB of bf16 blocks + a few MiB f32 temporaries per
               # grid step -> fits the default scoped VMEM on v5e/v6e/v7x with headroom.
               # (Raise vmem_limit_bytes via pltpu.CompilerParams to go bigger on v5e/v6e.)


def _round_up(x, m):
    return ((x + m - 1) // m) * m


def _segment_matrices(k, d):
    """0/1 selector matrices for segmented reductions over a lane-dense (K*D,) axis."""
    kd = k * d
    lane = jnp.arange(kd)
    seg = lane // d                       # neighbor id of each lane
    feat = lane % d                       # feature id of each lane
    p = (seg[:, None] == jnp.arange(k)[None, :]).astype(jnp.float32)    # (KD, K)
    q = (feat[:, None] == jnp.arange(d)[None, :]).astype(jnp.float32)   # (KD, D)
    return p, jnp.transpose(p), q         # P, P^T, Q


def _kgcn_iter_kernel(self_ref, nbr_ref, rel_ref, usr_ref, w_ref, b_ref,
                      p_ref, pt_ref, q_ref, out_ref, *, inv_k, inv_d, use_tanh):
    # block shapes:
    #   self (1, TN, D)   nbr/rel (1, TN, K*D)   usr (1, 1, K*D)
    #   w (D, D)  b (1, D)  p (K*D, K)  p^T (K, K*D)  q (K*D, D)  out (1, TN, D)
    nbr = nbr_ref[0].astype(jnp.float32)        # (TN, K*D)
    rel = rel_ref[0].astype(jnp.float32)        # (TN, K*D)
    self_v = self_ref[0].astype(jnp.float32)    # (TN, D)
    u_rep = usr_ref[0].astype(jnp.float32)      # (1, K*D)  user tiled K times along lanes
    p = p_ref[...]                              # (K*D, K)
    p_t = pt_ref[...]                           # (K, K*D)
    q = q_ref[...]                              # (K*D, D)

    # user_relation_score = mean_d(rel[n,k,d] * user[n,d])  -> segmented sum via P (MXU)
    score = jnp.dot(rel * u_rep, p, preferred_element_type=jnp.float32) * inv_d   # (TN, K)
    # softmax over the neighbor axis
    score = score - jnp.max(score, axis=-1, keepdims=True)
    e = jnp.exp(score)
    attn = e * pl.reciprocal(jnp.sum(e, axis=-1, keepdims=True), approx=True)     # (TN, K)

    # expand weights back to the lane-dense layout and take the weighted neighbor mean
    attn_rep = jnp.dot(attn, p_t, preferred_element_type=jnp.float32)             # (TN, K*D)
    agg = jnp.dot(attn_rep * nbr, q, preferred_element_type=jnp.float32) * inv_k  # (TN, D)

    # GCNCombiner ('sum' aggregator): act((self + agg) @ W^T + b)
    h = self_v + agg
    y = jnp.dot(h, w_ref[...], preferred_element_type=jnp.float32) + b_ref[...]
    y = jnp.tanh(y) if use_tanh else jnp.maximum(y, 0.0)
    out_ref[0] = y.astype(out_ref.dtype)


def kgcn_iteration(self_v, nbr, rel, usr_rep, w_t, bias, p_mat, pt_mat, q_mat,
                   *, m_rows, use_tanh):
    """One fused KGCN iteration (all hops concatenated along the row axis).

    self_v : (B, >=m_rows, D) bf16      nbr/rel : (B, >=m_rows, K*D) bf16
    usr_rep: (B, 1, K*D) bf16           w_t: (D, D) f32   bias: (1, D) f32
    Only the first m_rows rows per batch element are processed / written.
    """
    B = usr_rep.shape[0]
    D = self_v.shape[-1]
    KD = nbr.shape[-1]
    K = KD // D

    tn = min(_TN_MAX, _round_up(m_rows, 8))
    n_tiles = pl.cdiv(m_rows, tn)

    kernel = functools.partial(_kgcn_iter_kernel, inv_k=1.0 / K, inv_d=1.0 / D,
                               use_tanh=use_tanh)
    return pl.pallas_call(
        kernel,
        out_shape=jax.ShapeDtypeStruct((B, m_rows, D), jnp.bfloat16),
        grid=(B, n_tiles),
        in_specs=[
            pl.BlockSpec((1, tn, D), lambda b, m: (b, m, 0)),     # self
            pl.BlockSpec((1, tn, KD), lambda b, m: (b, m, 0)),    # neighbors (lane-dense)
            pl.BlockSpec((1, tn, KD), lambda b, m: (b, m, 0)),    # relations (lane-dense)
            pl.BlockSpec((1, 1, KD), lambda b, m: (b, 0, 0)),     # per-batch user (tiled)
            pl.BlockSpec((D, D), lambda b, m: (0, 0)),            # W^T (resident)
            pl.BlockSpec((1, D), lambda b, m: (0, 0)),            # bias (resident)
            pl.BlockSpec((KD, K), lambda b, m: (0, 0)),           # P (resident)
            pl.BlockSpec((K, KD), lambda b, m: (0, 0)),           # P^T (resident)
            pl.BlockSpec((KD, D), lambda b, m: (0, 0)),           # Q (resident)
        ],
        out_specs=pl.BlockSpec((1, tn, D), lambda b, m: (b, m, 0)),
        compiler_params=pltpu.CompilerParams(
            dimension_semantics=("parallel", "parallel")),
    )(self_v, nbr, rel, usr_rep, w_t, bias, p_mat, pt_mat, q_mat)


def kgcn_item_encoder(entities, relations, user_emb, params, *, n_iter, n_neighbor, dim):
    """JAX/Pallas equivalent of KGCNItemEncoder.forward (aggregator_type='sum')."""
    K, D = n_neighbor, dim
    B = user_emb.shape[0]

    # bf16 HBM traffic for the (memory-bound) kernel path.
    ent_tab = params["ent_emb"].astype(jnp.bfloat16)
    rel_tab = params["rel_emb"].astype(jnp.bfloat16)
    usr_rep = jnp.tile(user_emb.astype(jnp.bfloat16), (1, K)).reshape(B, 1, K * D)

    # rows per iteration: iteration i fuses hops 0 .. n_iter-i-1
    m_rows = [sum(K ** h for h in range(n_iter - i)) for i in range(n_iter)]

    # Concatenate index tables across hops, then gather once (lane-dense slabs).
    self_idx = jnp.concatenate([entities[h].reshape(B, -1) for h in range(n_iter)], axis=1)
    nbr_idx = jnp.concatenate([entities[h + 1].reshape(B, -1) for h in range(n_iter)], axis=1)
    rel_idx = jnp.concatenate([relations[h].reshape(B, -1) for h in range(n_iter)], axis=1)

    self_cur = ent_tab[self_idx]                                   # (B, M0, D)
    nbr_cur = ent_tab[nbr_idx].reshape(B, m_rows[0], K * D)        # (B, M0, K*D)
    rel_all = rel_tab[rel_idx].reshape(B, m_rows[0], K * D)        # (B, M0, K*D), reused

    p_mat, pt_mat, q_mat = _segment_matrices(K, D)

    out = None
    for i in range(n_iter):
        use_tanh = (i == n_iter - 1)
        w_t = params["agg_W"][i].T.astype(jnp.float32)             # nn.Linear: y = x @ W^T + b
        bias = params["agg_b"][i].reshape(1, D).astype(jnp.float32)
        out = kgcn_iteration(self_cur, nbr_cur, rel_all, usr_rep, w_t, bias,
                             p_mat, pt_mat, q_mat, m_rows=m_rows[i], use_tanh=use_tanh)
        if i + 1 < n_iter:
            # iteration i+1's self rows are the prefix of this output; its neighbors are
            # rows [1:] regrouped K-at-a-time into lane-dense (K*D) slabs.
            self_cur = out
            nbr_cur = out[:, 1:, :].reshape(B, m_rows[i + 1], K * D)
            # rel_all is reused as-is; the smaller grid only reads its prefix rows.
    return out.reshape(-1, D).astype(jnp.float32)


def kgcn_item_encoder_ref(entities, relations, user_emb, params, *, n_iter, n_neighbor, dim):
    """Pure-JAX reference mirroring the PyTorch semantics."""
    ent_table = params["ent_emb"]
    rel_table = params["rel_emb"]
    entity_vectors = [ent_table[e] for e in entities]
    relation_vectors = [rel_table[r] for r in relations]
    B = user_emb.shape[0]
    for i in range(n_iter):
        act = jnp.tanh if i == n_iter - 1 else (lambda x: jnp.maximum(x, 0.0))
        W = params["agg_W"][i]
        b = params["agg_b"][i]
        next_vectors = []
        for hop in range(n_iter - i):
            nv = entity_vectors[hop + 1].reshape(B, -1, n_neighbor, dim)
            nr = relation_vectors[hop].reshape(B, -1, n_neighbor, dim)
            u = user_emb.reshape(B, 1, 1, dim)
            score = jnp.mean(nr * u, axis=-1)
            score = jax.nn.softmax(score, axis=-1)[..., None]
            agg = jnp.mean(score * nv, axis=-2)                     # (B, M, D)
            h = entity_vectors[hop].reshape(B, -1, dim) + agg
            y = act(h @ W.T + b)
            next_vectors.append(y)
        entity_vectors = next_vectors
    return entity_vectors[0].reshape(-1, dim)


if __name__ == "__main__":
    # config
    n_iter = 2
    dim = 32
    n_neighbor = 8
    batch = 2
    n_entities = 50
    n_relations = 10

    key = jax.random.PRNGKey(0)
    k_ent, k_rel, k_user, k_idx, k_w, k_b = jax.random.split(key, 6)

    # deterministic parameters (synthetic; shapes follow the module __init__)
    params = {
        "ent_emb": jax.random.normal(k_ent, (n_entities, dim), jnp.float32) * 0.1,
        "rel_emb": jax.random.normal(k_rel, (n_relations, dim), jnp.float32) * 0.1,
        "agg_W": [jax.random.normal(jax.random.fold_in(k_w, i), (dim, dim), jnp.float32) * 0.1
                  for i in range(n_iter)],
        "agg_b": [jax.random.normal(jax.random.fold_in(k_b, i), (dim,), jnp.float32) * 0.01
                  for i in range(n_iter)],
    }

    # multi-hop neighbor / relation index lists
    entities = []
    relations = []
    for h in range(n_iter + 1):
        entities.append(jax.random.randint(jax.random.fold_in(k_idx, 2 * h),
                                           (batch, n_neighbor ** h), 0, n_entities))
    for h in range(n_iter):
        relations.append(jax.random.randint(jax.random.fold_in(k_idx, 2 * h + 1),
                                            (batch, n_neighbor ** (h + 1)), 0, n_relations))
    user_embeddings = jax.random.normal(k_user, (batch, dim), jnp.float32) * 0.1

    out = kgcn_item_encoder(entities, relations, user_embeddings, params,
                            n_iter=n_iter, n_neighbor=n_neighbor, dim=dim)
    out = jax.block_until_ready(out)

    # reference in f32, fed the same bf16-rounded embeddings as the kernel path
    params_ref = dict(params)
    params_ref["ent_emb"] = params["ent_emb"].astype(jnp.bfloat16).astype(jnp.float32)
    params_ref["rel_emb"] = params["rel_emb"].astype(jnp.bfloat16).astype(jnp.float32)
    user_ref = user_embeddings.astype(jnp.bfloat16).astype(jnp.float32)
    ref = kgcn_item_encoder_ref(entities, relations, user_ref, params_ref,
                                n_iter=n_iter, n_neighbor=n_neighbor, dim=dim)

    assert out.shape == (batch, dim), out.shape
    max_err = float(jnp.max(jnp.abs(out - ref)))
    assert jnp.allclose(out, ref, atol=1e-2, rtol=1e-2), max_err
    print("KERNEL_OK")
</pallas_src>

<mosaic_0001>
module attributes {stable_mosaic.version = 11 : i64} {
  func.func @_kgcn_iter_kernel(%arg0: i32, %arg1: i32, %arg2: memref<1x16x32xbf16, #tpu.memory_space<vmem>>, %arg3: memref<1x16x256xbf16, #tpu.memory_space<vmem>>, %arg4: memref<1x16x256xbf16, #tpu.memory_space<vmem>>, %arg5: memref<1x1x256xbf16, #tpu.memory_space<vmem>>, %arg6: memref<32x32xf32, #tpu.memory_space<vmem>>, %arg7: memref<1x32xf32, #tpu.memory_space<vmem>>, %arg8: memref<256x8xf32, #tpu.memory_space<vmem>>, %arg9: memref<8x256xf32, #tpu.memory_space<vmem>>, %arg10: memref<256x32xf32, #tpu.memory_space<vmem>>, %arg11: memref<1x16x32xbf16, #tpu.memory_space<vmem>>) attributes {dimension_semantics = [#tpu.dimension_semantics<parallel>, #tpu.dimension_semantics<parallel>], iteration_bounds = array<i64: 2, 1>, scalar_prefetch = 0 : i64, scratch_operands = 0 : i64, tpu.core_type = #tpu.core_type<tc>, window_params = [{transform_indices = @transform_0, window_bounds = array<i64: 1, 16, 32>}, {transform_indices = @transform_1, window_bounds = array<i64: 1, 16, 256>}, {transform_indices = @transform_2, window_bounds = array<i64: 1, 16, 256>}, {transform_indices = @transform_3, window_bounds = array<i64: 1, 1, 256>}, {pipeline_mode = #tpu.pipeline_mode<synchronous>, transform_indices = @transform_4, window_bounds = array<i64: 32, 32>}, {pipeline_mode = #tpu.pipeline_mode<synchronous>, transform_indices = @transform_5, window_bounds = array<i64: 1, 32>}, {pipeline_mode = #tpu.pipeline_mode<synchronous>, transform_indices = @transform_6, window_bounds = array<i64: 256, 8>}, {pipeline_mode = #tpu.pipeline_mode<synchronous>, transform_indices = @transform_7, window_bounds = array<i64: 8, 256>}, {pipeline_mode = #tpu.pipeline_mode<synchronous>, transform_indices = @transform_8, window_bounds = array<i64: 256, 32>}, {transform_indices = @transform_9, window_bounds = array<i64: 1, 16, 32>}]} {
    %c0 = arith.constant 0 : index
    %c0_0 = arith.constant 0 : index
    %c0_1 = arith.constant 0 : index
    %0 = vector.load %arg3[%c0, %c0_0, %c0_1] : memref<1x16x256xbf16, #tpu.memory_space<vmem>>, vector<1x16x256xbf16>
    %1 = vector.shape_cast %0 : vector<1x16x256xbf16> to vector<16x256xbf16>
    %2 = arith.extf %1 : vector<16x256xbf16> to vector<16x256xf32>
    %c0_2 = arith.constant 0 : index
    %c0_3 = arith.constant 0 : index
    %c0_4 = arith.constant 0 : index
    %3 = vector.load %arg4[%c0_2, %c0_3, %c0_4] : memref<1x16x256xbf16, #tpu.memory_space<vmem>>, vector<1x16x256xbf16>
    %4 = vector.shape_cast %3 : vector<1x16x256xbf16> to vector<16x256xbf16>
    %5 = arith.extf %4 : vector<16x256xbf16> to vector<16x256xf32>
    %c0_5 = arith.constant 0 : index
    %c0_6 = arith.constant 0 : index
    %c0_7 = arith.constant 0 : index
    %6 = vector.load %arg2[%c0_5, %c0_6, %c0_7] : memref<1x16x32xbf16, #tpu.memory_space<vmem>>, vector<1x16x32xbf16>
    %7 = vector.shape_cast %6 : vector<1x16x32xbf16> to vector<16x32xbf16>
    %8 = arith.extf %7 : vector<16x32xbf16> to vector<16x32xf32>
    %c0_8 = arith.constant 0 : index
    %c0_9 = arith.constant 0 : index
    %c0_10 = arith.constant 0 : index
    %9 = vector.load %arg5[%c0_8, %c0_9, %c0_10] : memref<1x1x256xbf16, #tpu.memory_space<vmem>>, vector<1x1x256xbf16>
    %10 = vector.shape_cast %9 : vector<1x1x256xbf16> to vector<1x256xbf16>
    %11 = arith.extf %10 : vector<1x256xbf16> to vector<1x256xf32>
    %c0_11 = arith.constant 0 : index
    %c0_12 = arith.constant 0 : index
    %12 = vector.load %arg8[%c0_11, %c0_12] : memref<256x8xf32, #tpu.memory_space<vmem>>, vector<256x8xf32>
    %c0_13 = arith.constant 0 : index
    %c0_14 = arith.constant 0 : index
    %13 = vector.load %arg9[%c0_13, %c0_14] : memref<8x256xf32, #tpu.memory_space<vmem>>, vector<8x256xf32>
    %c0_15 = arith.constant 0 : index
    %c0_16 = arith.constant 0 : index
    %14 = vector.load %arg10[%c0_15, %c0_16] : memref<256x32xf32, #tpu.memory_space<vmem>>, vector<256x32xf32>
    %15 = vector.broadcast %11 : vector<1x256xf32> to vector<16x256xf32>
    %16 = arith.mulf %5, %15 : vector<16x256xf32>
    %cst = arith.constant dense<0.000000e+00> : vector<16x8xf32>
    %17 = tpu.matmul %16, %12, %cst {dimension_numbers = #tpu.dot_dimension_numbers<[1], [0], [0], [1], [0, 0, 1, 1], [], []>} : vector<16x256xf32>, vector<256x8xf32>, vector<16x8xf32> -> vector<16x8xf32>
    %cst_17 = arith.constant 3.125000e-02 : f32
    %18 = vector.broadcast %cst_17 : f32 to vector<16x8xf32>
    %19 = arith.mulf %17, %18 : vector<16x8xf32>
    %cst_18 = arith.constant dense<0xFF800000> : vector<16xf32>
    %20 = vector.multi_reduction <maximumf>, %19, %cst_18 [1] : vector<16x8xf32> to vector<16xf32>
    %21 = vector.shape_cast %20 : vector<16xf32> to vector<16x1xf32>
    %22 = vector.broadcast %21 : vector<16x1xf32> to vector<16x8xf32>
    %23 = arith.subf %19, %22 : vector<16x8xf32>
    %24 = math.exp %23 : vector<16x8xf32>
    %cst_19 = arith.constant dense<0.000000e+00> : vector<16xf32>
    %25 = vector.multi_reduction <add>, %24, %cst_19 [1] : vector<16x8xf32> to vector<16xf32>
    %26 = vector.shape_cast %25 : vector<16xf32> to vector<16x1xf32>
    %27 = tpu.reciprocal %26 {approx = true} : vector<16x1xf32> -> vector<16x1xf32>
    %28 = vector.broadcast %27 : vector<16x1xf32> to vector<16x8xf32>
    %29 = arith.mulf %24, %28 : vector<16x8xf32>
    %cst_20 = arith.constant dense<0.000000e+00> : vector<16x256xf32>
    %30 = tpu.matmul %29, %13, %cst_20 {dimension_numbers = #tpu.dot_dimension_numbers<[1], [0], [0], [1], [0, 0, 1, 1], [], []>} : vector<16x8xf32>, vector<8x256xf32>, vector<16x256xf32> -> vector<16x256xf32>
    %31 = arith.mulf %30, %2 : vector<16x256xf32>
    %cst_21 = arith.constant dense<0.000000e+00> : vector<16x32xf32>
    %32 = tpu.matmul %31, %14, %cst_21 {dimension_numbers = #tpu.dot_dimension_numbers<[1], [0], [0], [1], [0, 0, 1, 1], [], []>} : vector<16x256xf32>, vector<256x32xf32>, vector<16x32xf32> -> vector<16x32xf32>
    %cst_22 = arith.constant 1.250000e-01 : f32
    %33 = vector.broadcast %cst_22 : f32 to vector<16x32xf32>
    %34 = arith.mulf %32, %33 : vector<16x32xf32>
    %35 = arith.addf %8, %34 : vector<16x32xf32>
    %c0_23 = arith.constant 0 : index
    %c0_24 = arith.constant 0 : index
    %36 = vector.load %arg6[%c0_23, %c0_24] : memref<32x32xf32, #tpu.memory_space<vmem>>, vector<32x32xf32>
    %cst_25 = arith.constant dense<0.000000e+00> : vector<16x32xf32>
    %37 = tpu.matmul %35, %36, %cst_25 {dimension_numbers = #tpu.dot_dimension_numbers<[1], [0], [0], [1], [0, 0, 1, 1], [], []>} : vector<16x32xf32>, vector<32x32xf32>, vector<16x32xf32> -> vector<16x32xf32>
    %c0_26 = arith.constant 0 : index
    %c0_27 = arith.constant 0 : index
    %38 = vector.load %arg7[%c0_26, %c0_27] : memref<1x32xf32, #tpu.memory_space<vmem>>, vector<1x32xf32>
    %39 = vector.broadcast %38 : vector<1x32xf32> to vector<16x32xf32>
    %40 = arith.addf %37, %39 : vector<16x32xf32>
    %cst_28 = arith.constant 0.000000e+00 : f32
    %41 = vector.broadcast %cst_28 : f32 to vector<16x32xf32>
    %42 = arith.maximumf %40, %41 : vector<16x32xf32>
    %43 = arith.truncf %42 : vector<16x32xf32> to vector<16x32xbf16>
    %c0_29 = arith.constant 0 : index
    %c0_30 = arith.constant 0 : index
    %c0_31 = arith.constant 0 : index
    %44 = vector.load %arg11[%c0_29, %c0_30, %c0_31] : memref<1x16x32xbf16, #tpu.memory_space<vmem>>, vector<1x16x32xbf16>
    %45 = vector.shape_cast %44 : vector<1x16x32xbf16> to vector<16x32xbf16>
    %46 = vector.shape_cast %43 : vector<16x32xbf16> to vector<1x16x32xbf16>
    tpu.vector_store %arg11[%c0_29, %c0_30, %c0_31], %46 {strides = array<i32>} : memref<1x16x32xbf16, #tpu.memory_space<vmem>>, vector<1x16x32xbf16>,
    return
  }
  func.func @transform_0(%arg0: i32, %arg1: i32) -> (i32, i32, i32) {
    %c0_i32 = arith.constant 0 : i32
    %c0_i32_0 = arith.constant 0 : i32
    return %arg0, %arg1, %c0_i32 : i32, i32, i32
  }
  func.func @transform_1(%arg0: i32, %arg1: i32) -> (i32, i32, i32) {
    %c0_i32 = arith.constant 0 : i32
    %c0_i32_0 = arith.constant 0 : i32
    return %arg0, %arg1, %c0_i32 : i32, i32, i32
  }
  func.func @transform_2(%arg0: i32, %arg1: i32) -> (i32, i32, i32) {
    %c0_i32 = arith.constant 0 : i32
    %c0_i32_0 = arith.constant 0 : i32
    return %arg0, %arg1, %c0_i32 : i32, i32, i32
  }
  func.func @transform_3(%arg0: i32, %arg1: i32) -> (i32, i32, i32) {
    %c0_i32 = arith.constant 0 : i32
    %c0_i32_0 = arith.constant 0 : i32
    %c0_i32_1 = arith.constant 0 : i32
    return %arg0, %c0_i32, %c0_i32_0 : i32, i32, i32
  }
  func.func @transform_4(%arg0: i32, %arg1: i32) -> (i32, i32) {
    %c0_i32 = arith.constant 0 : i32
    %c0_i32_0 = arith.constant 0 : i32
    %c0_i32_1 = arith.constant 0 : i32
    return %c0_i32, %c0_i32_0 : i32, i32
  }
  func.func @transform_5(%arg0: i32, %arg1: i32) -> (i32, i32) {
    %c0_i32 = arith.constant 0 : i32
    %c0_i32_0 = arith.constant 0 : i32
    %c0_i32_1 = arith.constant 0 : i32
    return %c0_i32, %c0_i32_0 : i32, i32
  }
  func.func @transform_6(%arg0: i32, %arg1: i32) -> (i32, i32) {
    %c0_i32 = arith.constant 0 : i32
    %c0_i32_0 = arith.constant 0 : i32
    %c0_i32_1 = arith.constant 0 : i32
    return %c0_i32, %c0_i32_0 : i32, i32
  }
  func.func @transform_7(%arg0: i32, %arg1: i32) -> (i32, i32) {
    %c0_i32 = arith.constant 0 : i32
    %c0_i32_0 = arith.constant 0 : i32
    %c0_i32_1 = arith.constant 0 : i32
    return %c0_i32, %c0_i32_0 : i32, i32
  }
  func.func @transform_8(%arg0: i32, %arg1: i32) -> (i32, i32) {
    %c0_i32 = arith.constant 0 : i32
    %c0_i32_0 = arith.constant 0 : i32
    %c0_i32_1 = arith.constant 0 : i32
    return %c0_i32, %c0_i32_0 : i32, i32
  }
  func.func @transform_9(%arg0: i32, %arg1: i32) -> (i32, i32, i32) {
    %c0_i32 = arith.constant 0 : i32
    %c0_i32_0 = arith.constant 0 : i32
    return %arg0, %arg1, %c0_i32 : i32, i32, i32
  }
}

</mosaic_0001>

<llo_original>
// kernel: tpu_custom_call.1
$region0: #{tpu_custom_call.1}
  #allocation0 [shape = 'u32[]', space=smem, size = 0x4, offset = 0x4, fixed_abs, tag = 'smem constant byte address 0x4 - core index']
  #allocation1 [shape = 'u32[144,128]{1,0:T(1,128)}', space=vmem, size = 0x12000, scoped, tag = 'internal scratch']
  %s0 = inlined_call_operand.vmem [shape: bf16[2,9,32], index: 0, kind: input, shape index: {}]
  %s1 = inlined_call_operand.vmem [shape: bf16[2,9,256], index: 1, kind: input, shape index: {}]
  %s2 = inlined_call_operand.vmem [shape: bf16[2,9,256], index: 2, kind: input, shape index: {}]
  %s3 = inlined_call_operand.vmem [shape: bf16[2,1,256], index: 3, kind: input, shape index: {}]
  %s4 = inlined_call_operand.vmem [shape: f32[32,32], index: 4, kind: input, shape index: {}]
  %s5 = inlined_call_operand.vmem [shape: f32[1,32], index: 5, kind: input, shape index: {}]
  %s6 = inlined_call_operand.vmem [shape: f32[256,8], index: 6, kind: input, shape index: {}]
  %s7 = inlined_call_operand.vmem [shape: f32[8,256], index: 7, kind: input, shape index: {}]
  %s8 = inlined_call_operand.vmem [shape: f32[256,32], index: 8, kind: input, shape index: {}]
  %s9 = inlined_call_operand.vmem [shape: bf16[2,9,32], index: 9, kind: output, shape index: {}]
  %s10 = sld [smem:[#allocation0]]
  $region69: #{tpu_custom_call.1} parent=0
    _
  %s12 = ssub.s32 1, %s10
  %s13 = scalar_select 0, %s12, %s10
  loop: start=0, step=1, limit=4
  $region2: #{tpu_custom_call.1} parent=0 // loop_pre_header
    _
  $region3: #{tpu_custom_call.1} parent=0 // loop_header
    %s15 = sphi 0, %s19
    %p16 = scmp.ge.s32.totalorder %s15, 4
    %s22 = sphi 0, %s34
    %s23 = sphi 0, %s30
    %s24 = sphi 0, %s22
    %s25 = sphi 0, %s23
    %s26 = sphi 0, %s24
    %s27 = sphi 0, %s25
    %s39 = sphi 0, %s41
    %s42 = sphi 0, %s39
    %s43 = sphi 0, %s42
    %s59 = sphi 0, %s43
    %s67 = sphi 0, %s69
    %s70 = sphi 0, %s67
    %s71 = sphi 0, %s70
    %s87 = sphi 0, %s71
    %s95 = sphi 0, %s97
    %s98 = sphi 0, %s95
    %s99 = sphi 0, %s98
    %s115 = sphi 0, %s99
    %s121 = sphi 0, %s123
    %s124 = sphi 0, %s121
    %s125 = sphi 0, %s124
    %s141 = sphi 0, %s125
    %s145 = sphi 0, %s145
    %s147 = sphi 0, %s145
    %s148 = sphi 0, %s147
    %s162 = sphi 0, %s148
    %s166 = sphi 0, %s166
    %s168 = sphi 0, %s166
    %s169 = sphi 0, %s168
    %s183 = sphi 0, %s169
    %s187 = sphi 0, %s187
    %s189 = sphi 0, %s187
    %s190 = sphi 0, %s189
    %s204 = sphi 0, %s190
    %s208 = sphi 0, %s208
    %s210 = sphi 0, %s208
    %s211 = sphi 0, %s210
    %s225 = sphi 0, %s211
    %s229 = sphi 0, %s229
    %s231 = sphi 0, %s229
    %s232 = sphi 0, %s231
    %s246 = sphi 0, %s232
    %s254 = sphi 0, %s256
    %s257 = sphi 0, %s254
    %s258 = sphi 0, %s257
    %s274 = sphi 0, %s258
  $region4: #{tpu_custom_call.1} parent=0 // loop_header_branch
    %18 = sbr.rel (%p16) target = $region8
  $region5: #{tpu_custom_call.1} parent=0 // loop_body
    %s20 = ssub.s32 %s15, 1
    %s21 = ssub.s32 %s15, 2
    %s28 = sadd.s32 1, %s23
    %p29 = scmp.ge.s32.totalorder %s28, 1
    %s30 = scalar_select %p29, 0, %s28
    %s31 = sadd.s32 1, %s22
    %s32 = scalar_select %p29, %s31, %s22
    %p33 = scmp.ge.s32.totalorder %s32, 2
    %s34 = scalar_select %p33, 0, %s32
    %s35 = ssub.s32 %s22, %s34
    %s36 = ssub.s32 %s23, %s30
    %s37 = sor.u32 %s35, %s36
    %p38 = scmp.eq.s32.totalorder %s37, 0
    %s40 = sadd.s32 %s39, 1
    %s41 = scalar_select %p38, %s39, %s40
    %p44 = pneg %p38
    %p45 = scmp.eq.s32.totalorder %s15, 1
    %p46 = por %p44, %p45
    %p47 = scmp.ne.s32.totalorder %s39, %s42
    %p48 = scmp.eq.s32.totalorder %s15, 0
    %p49 = por %p47, %p48
    %p50 = scmp.ne.s32.totalorder %s39, %s42
    %p51 = scmp.eq.s32.totalorder %s20, 1
    %p52 = por %p50, %p51
    %p53 = scmp.ne.s32.totalorder %s42, %s43
    %p54 = scmp.eq.s32.totalorder %s20, 0
    %p55 = por %p53, %p54
    %p56 = scmp.ne.s32.totalorder %s42, %s43
    %p57 = scmp.eq.s32.totalorder %s21, 1
    %p58 = por %p56, %p57
    %p60 = scmp.ne.s32.totalorder %s43, %s59
    %p61 = scmp.eq.s32.totalorder %s21, 0
    %p62 = por %p60, %p61
    %s63 = ssub.s32 %s22, %s34
    %s64 = ssub.s32 %s23, %s30
    %s65 = sor.u32 %s63, %s64
    %p66 = scmp.eq.s32.totalorder %s65, 0
    %s68 = sadd.s32 %s67, 1
    %s69 = scalar_select %p66, %s67, %s68
    %p72 = pneg %p66
    %p73 = scmp.eq.s32.totalorder %s15, 1
    %p74 = por %p72, %p73
    %p75 = scmp.ne.s32.totalorder %s67, %s70
    %p76 = scmp.eq.s32.totalorder %s15, 0
    %p77 = por %p75, %p76
    %p78 = scmp.ne.s32.totalorder %s67, %s70
    %p79 = scmp.eq.s32.totalorder %s20, 1
    %p80 = por %p78, %p79
    %p81 = scmp.ne.s32.totalorder %s70, %s71
    %p82 = scmp.eq.s32.totalorder %s20, 0
    %p83 = por %p81, %p82
    %p84 = scmp.ne.s32.totalorder %s70, %s71
    %p85 = scmp.eq.s32.totalorder %s21, 1
    %p86 = por %p84, %p85
    %p88 = scmp.ne.s32.totalorder %s71, %s87
    %p89 = scmp.eq.s32.totalorder %s21, 0
    %p90 = por %p88, %p89
    %s91 = ssub.s32 %s22, %s34
    %s92 = ssub.s32 %s23, %s30
    %s93 = sor.u32 %s91, %s92
    %p94 = scmp.eq.s32.totalorder %s93, 0
    %s96 = sadd.s32 %s95, 1
    %s97 = scalar_select %p94, %s95, %s96
    %p100 = pneg %p94
    %p101 = scmp.eq.s32.totalorder %s15, 1
    %p102 = por %p100, %p101
    %p103 = scmp.ne.s32.totalorder %s95, %s98
    %p104 = scmp.eq.s32.totalorder %s15, 0
    %p105 = por %p103, %p104
    %p106 = scmp.ne.s32.totalorder %s95, %s98
    %p107 = scmp.eq.s32.totalorder %s20, 1
    %p108 = por %p106, %p107
    %p109 = scmp.ne.s32.totalorder %s98, %s99
    %p110 = scmp.eq.s32.totalorder %s20, 0
    %p111 = por %p109, %p110
    %p112 = scmp.ne.s32.totalorder %s98, %s99
    %p113 = scmp.eq.s32.totalorder %s21, 1
    %p114 = por %p112, %p113
    %p116 = scmp.ne.s32.totalorder %s99, %s115
    %p117 = scmp.eq.s32.totalorder %s21, 0
    %p118 = por %p116, %p117
    %s119 = ssub.s32 %s22, %s34
    %p120 = scmp.eq.s32.totalorder %s119, 0
    %s122 = sadd.s32 %s121, 1
    %s123 = scalar_select %p120, %s121, %s122
    %p126 = pneg %p120
    %p127 = scmp.eq.s32.totalorder %s15, 1
    %p128 = por %p126, %p127
    %p129 = scmp.ne.s32.totalorder %s121, %s124
    %p130 = scmp.eq.s32.totalorder %s15, 0
    %p131 = por %p129, %p130
    %p132 = scmp.ne.s32.totalorder %s121, %s124
    %p133 = scmp.eq.s32.totalorder %s20, 1
    %p134 = por %p132, %p133
    %p135 = scmp.ne.s32.totalorder %s124, %s125
    %p136 = scmp.eq.s32.totalorder %s20, 0
    %p137 = por %p135, %p136
    %p138 = scmp.ne.s32.totalorder %s124, %s125
    %p139 = scmp.eq.s32.totalorder %s21, 1
    %p140 = por %p138, %p139
    %p142 = scmp.ne.s32.totalorder %s125, %s141
    %p143 = scmp.eq.s32.totalorder %s21, 0
    %p144 = por %p142, %p143
    %s146 = sadd.s32 %s145, 1
    %p149 = scmp.eq.s32.totalorder %s15, 1
    %p150 = scmp.ne.s32.totalorder %s145, %s147
    %p151 = scmp.eq.s32.totalorder %s15, 0
    %p152 = por %p150, %p151
    %p153 = scmp.ne.s32.totalorder %s145, %s147
    %p154 = scmp.eq.s32.totalorder %s20, 1
    %p155 = por %p153, %p154
    %p156 = scmp.ne.s32.totalorder %s147, %s148
    %p157 = scmp.eq.s32.totalorder %s20, 0
    %p158 = por %p156, %p157
    %p159 = scmp.ne.s32.totalorder %s147, %s148
    %p160 = scmp.eq.s32.totalorder %s21, 1
    %p161 = por %p159, %p160
    %p163 = scmp.ne.s32.totalorder %s148, %s162
    %p164 = scmp.eq.s32.totalorder %s21, 0
    %p165 = por %p163, %p164
    %s167 = sadd.s32 %s166, 1
    %p170 = scmp.eq.s32.totalorder %s15, 1
    %p171 = scmp.ne.s32.totalorder %s166, %s168
    %p172 = scmp.eq.s32.totalorder %s15, 0
    %p173 = por %p171, %p172
    %p174 = scmp.ne.s32.totalorder %s166, %s168
    %p175 = scmp.eq.s32.totalorder %s20, 1
    %p176 = por %p174, %p175
    %p177 = scmp.ne.s32.totalorder %s168, %s169
    %p178 = scmp.eq.s32.totalorder %s20, 0
    %p179 = por %p177, %p178
    %p180 = scmp.ne.s32.totalorder %s168, %s169
    %p181 = scmp.eq.s32.totalorder %s21, 1
    %p182 = por %p180, %p181
    %p184 = scmp.ne.s32.totalorder %s169, %s183
    %p185 = scmp.eq.s32.totalorder %s21, 0
    %p186 = por %p184, %p185
    %s188 = sadd.s32 %s187, 1
    %p191 = scmp.eq.s32.totalorder %s15, 1
    %p192 = scmp.ne.s32.totalorder %s187, %s189
    %p193 = scmp.eq.s32.totalorder %s15, 0
    %p194 = por %p192, %p193
    %p195 = scmp.ne.s32.totalorder %s187, %s189
    %p196 = scmp.eq.s32.totalorder %s20, 1
    %p197 = por %p195, %p196
    %p198 = scmp.ne.s32.totalorder %s189, %s190
    %p199 = scmp.eq.s32.totalorder %s20, 0
    %p200 = por %p198, %p199
    %p201 = scmp.ne.s32.totalorder %s189, %s190
    %p202 = scmp.eq.s32.totalorder %s21, 1
    %p203 = por %p201, %p202
    %p205 = scmp.ne.s32.totalorder %s190, %s204
    %p206 = scmp.eq.s32.totalorder %s21, 0
    %p207 = por %p205, %p206
    %s209 = sadd.s32 %s208, 1
    %p212 = scmp.eq.s32.totalorder %s15, 1
    %p213 = scmp.ne.s32.totalorder %s208, %s210
    %p214 = scmp.eq.s32.totalorder %s15, 0
    %p215 = por %p213, %p214
    %p216 = scmp.ne.s32.totalorder %s208, %s210
    %p217 = scmp.eq.s32.totalorder %s20, 1
    %p218 = por %p216, %p217
    %p219 = scmp.ne.s32.totalorder %s210, %s211
    %p220 = scmp.eq.s32.totalorder %s20, 0
    %p221 = por %p219, %p220
    %p222 = scmp.ne.s32.totalorder %s210, %s211
    %p223 = scmp.eq.s32.totalorder %s21, 1
    %p224 = por %p222, %p223
    %p226 = scmp.ne.s32.totalorder %s211, %s225
    %p227 = scmp.eq.s32.totalorder %s21, 0
    %p228 = por %p226, %p227
    %s230 = sadd.s32 %s229, 1
    %p233 = scmp.eq.s32.totalorder %s15, 1
    %p234 = scmp.ne.s32.totalorder %s229, %s231
    %p235 = scmp.eq.s32.totalorder %s15, 0
    %p236 = por %p234, %p235
    %p237 = scmp.ne.s32.totalorder %s229, %s231
    %p238 = scmp.eq.s32.totalorder %s20, 1
    %p239 = por %p237, %p238
    %p240 = scmp.ne.s32.totalorder %s231, %s232
    %p241 = scmp.eq.s32.totalorder %s20, 0
    %p242 = por %p240, %p241
    %p243 = scmp.ne.s32.totalorder %s231, %s232
    %p244 = scmp.eq.s32.totalorder %s21, 1
    %p245 = por %p243, %p244
    %p247 = scmp.ne.s32.totalorder %s232, %s246
    %p248 = scmp.eq.s32.totalorder %s21, 0
    %p249 = por %p247, %p248
    %s250 = ssub.s32 %s22, %s34
    %s251 = ssub.s32 %s23, %s30
    %s252 = sor.u32 %s250, %s251
    %p253 = scmp.eq.s32.totalorder %s252, 0
    %s255 = sadd.s32 %s254, 1
    %s256 = scalar_select %p253, %s254, %s255
    %p259 = pneg %p253
    %p260 = scmp.eq.s32.totalorder %s15, 1
    %p261 = por %p259, %p260
    %p262 = scmp.ne.s32.totalorder %s254, %s257
    %p263 = scmp.eq.s32.totalorder %s15, 0
    %p264 = por %p262, %p263
    %p265 = scmp.ne.s32.totalorder %s254, %s257
    %p266 = scmp.eq.s32.totalorder %s20, 1
    %p267 = por %p265, %p266
    %p268 = scmp.ne.s32.totalorder %s257, %s258
    %p269 = scmp.eq.s32.totalorder %s20, 0
    %p270 = por %p268, %p269
    %p271 = scmp.ne.s32.totalorder %s257, %s258
    %p272 = scmp.eq.s32.totalorder %s21, 1
    %p273 = por %p271, %p272
    %p275 = scmp.ne.s32.totalorder %s258, %s274
    %p276 = scmp.eq.s32.totalorder %s21, 0
    %p277 = por %p275, %p276
    %p278 = scmp.le.s32.totalorder 1, %s15
    %p279 = scmp.lt.s32.totalorder %s15, 3
    %p280 = pnand %p278, %p279
    %p281 = pneg %p280
    // Predicated region
    $region9: #{tpu_custom_call.1} parent=5 // pred_check
      _
    $region10: #{tpu_custom_call.1} parent=5 // pred_check_branch
      %283 = sbr.rel (%p280) target = $region12
    $region11: #{tpu_custom_call.1} parent=5 // pred_region
      %s284 = ssub.s32 %s15, 1
      // Predicated region
      $region13: #{tpu_custom_call.1} parent=11 // pred_check
        %p285 = pneg %p158
      $region14: #{tpu_custom_call.1} parent=11 // pred_check_branch
        %287 = sbr.rel (%p285) target = $region16
      $region15: #{tpu_custom_call.1} parent=11 // pred_region
        _
      $region16: #{tpu_custom_call.1} parent=11 // pred_fallthru
        _
      // Predicated region
      $region17: #{tpu_custom_call.1} parent=11 // pred_check
        %p288 = pneg %p179
      $region18: #{tpu_custom_call.1} parent=11 // pred_check_branch
        %290 = sbr.rel (%p288) target = $region20
      $region19: #{tpu_custom_call.1} parent=11 // pred_region
        _
      $region20: #{tpu_custom_call.1} parent=11 // pred_fallthru
        _
      // Predicated region
      $region21: #{tpu_custom_call.1} parent=11 // pred_check
        %p291 = pneg %p200
      $region22: #{tpu_custom_call.1} parent=11 // pred_check_branch
        %293 = sbr.rel (%p291) target = $region24
      $region23: #{tpu_custom_call.1} parent=11 // pred_region
        _
      $region24: #{tpu_custom_call.1} parent=11 // pred_fallthru
        _
      // Predicated region
      $region25: #{tpu_custom_call.1} parent=11 // pred_check
        %p294 = pneg %p221
      $region26: #{tpu_custom_call.1} parent=11 // pred_check_branch
        %296 = sbr.rel (%p294) target = $region28
      $region27: #{tpu_custom_call.1} parent=11 // pred_region
        _
      $region28: #{tpu_custom_call.1} parent=11 // pred_fallthru
        _
      // Predicated region
      $region29: #{tpu_custom_call.1} parent=11 // pred_check
        %p297 = pneg %p242
      $region30: #{tpu_custom_call.1} parent=11 // pred_check_branch
        %299 = sbr.rel (%p297) target = $region32
      $region31: #{tpu_custom_call.1} parent=11 // pred_region
        _
      $region32: #{tpu_custom_call.1} parent=11 // pred_fallthru
        _
    $region12: #{tpu_custom_call.1} parent=5 // pred_fallthru
      _
    %p300 = scmp.lt.s32.totalorder %s15, 2
    // Predicated region
    $region33: #{tpu_custom_call.1} parent=5 // pred_check
      %p301 = pneg %p300
    $region34: #{tpu_custom_call.1} parent=5 // pred_check_branch
      %303 = sbr.rel (%p301) target = $region36
    $region35: #{tpu_custom_call.1} parent=5 // pred_region
      // Predicated region
      $region37: #{tpu_custom_call.1} parent=35 // pred_check
        %p304 = pneg %p49
      $region38: #{tpu_custom_call.1} parent=35 // pred_check_branch
        %306 = sbr.rel (%p304) target = $region40
      $region39: #{tpu_custom_call.1} parent=35 // pred_region
        %s307 = smul.u32 2, %s23
        %p308 = scmp.lt.s32.totalorder %s22, 1
        %s309 = scalar_select %p308, %s22, 1
        %p310 = scmp.lt.s32.totalorder %s307, 1
        %s311 = scalar_select %p310, %s307, 1
        %s312 = smul.addr %s309, 2
        %s313 = sadd.s32 %s311, %s312
        %s314 = smul.addr %s313, 4
        %s315 = scalar_lea.vmem %s0, %s314
        %s316 = smul.u32 2, %s23
      $region40: #{tpu_custom_call.1} parent=35 // pred_fallthru
        _
      // Predicated region
      $region41: #{tpu_custom_call.1} parent=35 // pred_check
        %p317 = pneg %p77
      $region42: #{tpu_custom_call.1} parent=35 // pred_check_branch
        %319 = sbr.rel (%p317) target = $region44
      $region43: #{tpu_custom_call.1} parent=35 // pred_region
        %s320 = smul.u32 2, %s23
        %p321 = scmp.lt.s32.totalorder %s22, 1
        %s322 = scalar_select %p321, %s22, 1
        %p323 = scmp.lt.s32.totalorder %s320, 1
        %s324 = scalar_select %p323, %s320, 1
        %s325 = smul.addr %s324, 2
        %s326 = smul.addr %s322, 4
        %s327 = sadd.s32 %s325, %s326
        %s328 = smul.addr %s327, 4
        %s329 = scalar_lea.vmem %s1, %s328
        %s330 = smul.u32 2, %s23
      $region44: #{tpu_custom_call.1} parent=35 // pred_fallthru
        _
      // Predicated region
      $region45: #{tpu_custom_call.1} parent=35 // pred_check
        %p331 = pneg %p105
      $region46: #{tpu_custom_call.1} parent=35 // pred_check_branch
        %333 = sbr.rel (%p331) target = $region48
      $region47: #{tpu_custom_call.1} parent=35 // pred_region
        %s334 = smul.u32 2, %s23
        %p335 = scmp.lt.s32.totalorder %s22, 1
        %s336 = scalar_select %p335, %s22, 1
        %p337 = scmp.lt.s32.totalorder %s334, 1
        %s338 = scalar_select %p337, %s334, 1
        %s339 = smul.addr %s338, 2
        %s340 = smul.addr %s336, 4
        %s341 = sadd.s32 %s339, %s340
        %s342 = smul.addr %s341, 4
        %s343 = scalar_lea.vmem %s2, %s342
        %s344 = smul.u32 2, %s23
      $region48: #{tpu_custom_call.1} parent=35 // pred_fallthru
        _
      // Predicated region
      $region49: #{tpu_custom_call.1} parent=35 // pred_check
        %p345 = pneg %p131
      $region50: #{tpu_custom_call.1} parent=35 // pred_check_branch
        %347 = sbr.rel (%p345) target = $region52
      $region51: #{tpu_custom_call.1} parent=35 // pred_region
        %p348 = scmp.lt.s32.totalorder %s22, 1
        %s349 = scalar_select %p348, %s22, 1
        %s350 = smul.addr %s349, 2
        %s351 = scalar_lea.vmem %s3, %s350
      $region52: #{tpu_custom_call.1} parent=35 // pred_fallthru
        _
    $region36: #{tpu_custom_call.1} parent=5 // pred_fallthru
      _
    %p352 = scmp.le.s32.totalorder 1, %s15
    %p353 = scmp.lt.s32.totalorder %s15, 3
    %p354 = pnand %p352, %p353
    %p355 = pneg %p354
    // Predicated region
    $region53: #{tpu_custom_call.1} parent=5 // pred_check
      _
    $region54: #{tpu_custom_call.1} parent=5 // pred_check_branch
      %357 = sbr.rel (%p354) target = $region56
    $region55: #{tpu_custom_call.1} parent=5 // pred_region
      %s358 = ssub.s32 %s15, 1
      %s359 = smul.u32 2, %s25
      %p360 = scmp.lt.s32.totalorder %s24, 1
      %s361 = scalar_select %p360, %s24, 1
      %p362 = scmp.lt.s32.totalorder %s359, 1
      %s363 = scalar_select %p362, %s359, 1
      %s364 = smul.addr %s361, 2
      %s365 = sadd.s32 %s363, %s364
      %s366 = smul.addr %s365, 4
      %s367 = scalar_lea.vmem %s0, %s366
      %p368 = pneg %p55
      %p369 = pneg %p52
      %s370 = smul.u32 2, %s25
      %p371 = scmp.lt.s32.totalorder %s24, 1
      %s372 = scalar_select %p371, %s24, 1
      %p373 = scmp.lt.s32.totalorder %s370, 1
      %s374 = scalar_select %p373, %s370, 1
      %s375 = smul.addr %s374, 2
      %s376 = smul.addr %s372, 4
      %s377 = sadd.s32 %s375, %s376
      %s378 = smul.addr %s377, 4
      %s379 = scalar_lea.vmem %s1, %s378
      %p380 = pneg %p83
      %p381 = pneg %p80
      %s382 = smul.u32 2, %s25
      %p383 = scmp.lt.s32.totalorder %s24, 1
      %s384 = scalar_select %p383, %s24, 1
      %p385 = scmp.lt.s32.totalorder %s382, 1
      %s386 = scalar_select %p385, %s382, 1
      %s387 = smul.addr %s386, 2
      %s388 = smul.addr %s384, 4
      %s389 = sadd.s32 %s387, %s388
      %s390 = smul.addr %s389, 4
      %s391 = scalar_lea.vmem %s2, %s390
      %p392 = pneg %p111
      %p393 = pneg %p108
      %p394 = scmp.lt.s32.totalorder %s24, 1
      %s395 = scalar_select %p394, %s24, 1
      %s396 = smul.addr %s395, 2
      %s397 = scalar_lea.vmem %s3, %s396
      %p398 = pneg %p137
      %p399 = pneg %p134
      %p400 = pneg %p158
      %p401 = pneg %p155
      %p402 = pneg %p179
      %p403 = pneg %p176
      %p404 = pneg %p200
      %p405 = pneg %p197
      %p406 = pneg %p221
      %p407 = pneg %p218
      %p408 = pneg %p242
      %p409 = pneg %p239
      %p410 = pneg %p270
      %p411 = pneg %p267
      %s412 = smul.u32 2, %s25
      %p413 = scmp.lt.s32.totalorder %s24, 1
      %s414 = scalar_select %p413, %s24, 1
      %p415 = scmp.lt.s32.totalorder %s412, 1
      %s416 = scalar_select %p415, %s412, 1
      %s417 = smul.addr %s414, 2
      %s418 = sadd.s32 %s416, %s417
      %s419 = smul.addr %s418, 4
      %s420 = scalar_lea.vmem %s9, %s419
      %s421 = smul.u32 2, %s25
      %p422 = scmp.lt.s32.totalorder %s24, 1
      %s423 = scalar_select %p422, %s24, 1
      %p424 = scmp.lt.s32.totalorder %s421, 1
      %s425 = scalar_select %p424, %s421, 1
      %s426 = smul.addr %s423, 2
      %s427 = sadd.s32 %s425, %s426
      %s428 = smul.addr %s427, 4
      %s429 = scalar_lea.vmem %s0, %s428
      %s430 = smul.u32 2, %s25
      %s431 = smul.u32 2, %s25
      %p432 = scmp.lt.s32.totalorder %s24, 1
      %s433 = scalar_select %p432, %s24, 1
      %p434 = scmp.lt.s32.totalorder %s431, 1
      %s435 = scalar_select %p434, %s431, 1
      %s436 = smul.addr %s435, 2
      %s437 = smul.addr %s433, 4
      %s438 = sadd.s32 %s436, %s437
      %s439 = smul.addr %s438, 4
      %s440 = scalar_lea.vmem %s1, %s439
      %s441 = smul.u32 2, %s25
      %s442 = smul.u32 2, %s25
      %p443 = scmp.lt.s32.totalorder %s24, 1
      %s444 = scalar_select %p443, %s24, 1
      %p445 = scmp.lt.s32.totalorder %s442, 1
      %s446 = scalar_select %p445, %s442, 1
      %s447 = smul.addr %s446, 2
      %s448 = smul.addr %s444, 4
      %s449 = sadd.s32 %s447, %s448
      %s450 = smul.addr %s449, 4
      %s451 = scalar_lea.vmem %s2, %s450
      %s452 = smul.u32 2, %s25
      %p453 = scmp.lt.s32.totalorder %s24, 1
      %s454 = scalar_select %p453, %s24, 1
      %s455 = smul.addr %s454, 2
      %s456 = scalar_lea.vmem %s3, %s455
      %s457 = smul.u32 2, %s25
      %p458 = scmp.lt.s32.totalorder %s24, 1
      %s459 = scalar_select %p458, %s24, 1
      %p460 = scmp.lt.s32.totalorder %s457, 1
      %s461 = scalar_select %p460, %s457, 1
      %s462 = smul.addr %s459, 2
      %s463 = sadd.s32 %s461, %s462
      %s464 = smul.addr %s463, 4
      %s465 = scalar_lea.vmem %s9, %s464
      %s466 = smul.u32 2, %s25
      %v467 = vld [vmem:[%s440] sm:$0xff]
      %v468 = vld [vmem:[%s440 + $0x8] sm:$0xff]
      %v469 = vunpack.c.l.bf16 %v467
      %v470 = vunpack.c.h.bf16 %v467
      %v471 = vunpack.c.l.bf16 %v468
      %v472 = vunpack.c.h.bf16 %v468
      %v473 = vld [vmem:[%s451] sm:$0xff]
      %v474 = vld [vmem:[%s451 + $0x8] sm:$0xff]
      %v475 = vunpack.c.l.bf16 %v473
      %v476 = vunpack.c.h.bf16 %v473
      %v477 = vunpack.c.l.bf16 %v474
      %v478 = vunpack.c.h.bf16 %v474
      %v479 = vld [vmem:[%s429] sm:$0xf]
      %v480 = vld [vmem:[%s429 + $0x4] sm:$0xf]
      %v481 = vunpack.c.l.bf16 %v479
      %v482 = vunpack.c.l.bf16 %v480
      %v483 = vld [vmem:[%s456] sm:$0x3]
      %v484 = vunpack.c.l.bf16 %v483
      %v485 = vld [vmem:[%s6] sm:$0xff]
      %v486 = vld [vmem:[%s6 + $0x8] sm:$0xff]
      %v487 = vld [vmem:[%s6 + $0x10] sm:$0xff]
      %v488 = vld [vmem:[%s6 + $0x18] sm:$0xff]
      %v489 = vld [vmem:[%s6 + $0x20] sm:$0xff]
      %v490 = vld [vmem:[%s6 + $0x28] sm:$0xff]
      %v491 = vld [vmem:[%s6 + $0x30] sm:$0xff]
      %v492 = vld [vmem:[%s6 + $0x38] sm:$0xff]
      %v493 = vld [vmem:[%s6 + $0x40] sm:$0xff]
      %v494 = vld [vmem:[%s6 + $0x48] sm:$0xff]
      %v495 = vld [vmem:[%s6 + $0x50] sm:$0xff]
      %v496 = vld [vmem:[%s6 + $0x58] sm:$0xff]
      %v497 = vld [vmem:[%s6 + $0x60] sm:$0xff]
      %v498 = vld [vmem:[%s6 + $0x68] sm:$0xff]
      %v499 = vld [vmem:[%s6 + $0x70] sm:$0xff]
      %v500 = vld [vmem:[%s6 + $0x78] sm:$0xff]
      %v501 = vld [vmem:[%s6 + $0x80] sm:$0xff]
      %v502 = vld [vmem:[%s6 + $0x88] sm:$0xff]
      %v503 = vld [vmem:[%s6 + $0x90] sm:$0xff]
      %v504 = vld [vmem:[%s6 + $0x98] sm:$0xff]
      %v505 = vld [vmem:[%s6 + $0xa0] sm:$0xff]
      %v506 = vld [vmem:[%s6 + $0xa8] sm:$0xff]
      %v507 = vld [vmem:[%s6 + $0xb0] sm:$0xff]
      %v508 = vld [vmem:[%s6 + $0xb8] sm:$0xff]
      %v509 = vld [vmem:[%s6 + $0xc0] sm:$0xff]
      %v510 = vld [vmem:[%s6 + $0xc8] sm:$0xff]
      %v511 = vld [vmem:[%s6 + $0xd0] sm:$0xff]
      %v512 = vld [vmem:[%s6 + $0xd8] sm:$0xff]
      %v513 = vld [vmem:[%s6 + $0xe0] sm:$0xff]
      %v514 = vld [vmem:[%s6 + $0xe8] sm:$0xff]
      %v515 = vld [vmem:[%s6 + $0xf0] sm:$0xff]
      %v516 = vld [vmem:[%s6 + $0xf8] sm:$0xff]
      %v517 = vld [vmem:[%s7] sm:$0xff]
      %v518 = vld [vmem:[%s7 + $0x8] sm:$0xff]
      %v519 = vld [vmem:[%s8] sm:$0xff]
      %v520 = vld [vmem:[%s8 + $0x8] sm:$0xff]
      %v521 = vld [vmem:[%s8 + $0x10] sm:$0xff]
      %v522 = vld [vmem:[%s8 + $0x18] sm:$0xff]
      %v523 = vld [vmem:[%s8 + $0x20] sm:$0xff]
      %v524 = vld [vmem:[%s8 + $0x28] sm:$0xff]
      %v525 = vld [vmem:[%s8 + $0x30] sm:$0xff]
      %v526 = vld [vmem:[%s8 + $0x38] sm:$0xff]
      %v527 = vld [vmem:[%s8 + $0x40] sm:$0xff]
      %v528 = vld [vmem:[%s8 + $0x48] sm:$0xff]
      %v529 = vld [vmem:[%s8 + $0x50] sm:$0xff]
      %v530 = vld [vmem:[%s8 + $0x58] sm:$0xff]
      %v531 = vld [vmem:[%s8 + $0x60] sm:$0xff]
      %v532 = vld [vmem:[%s8 + $0x68] sm:$0xff]
      %v533 = vld [vmem:[%s8 + $0x70] sm:$0xff]
      %v534 = vld [vmem:[%s8 + $0x78] sm:$0xff]
      %v535 = vld [vmem:[%s8 + $0x80] sm:$0xff]
      %v536 = vld [vmem:[%s8 + $0x88] sm:$0xff]
      %v537 = vld [vmem:[%s8 + $0x90] sm:$0xff]
      %v538 = vld [vmem:[%s8 + $0x98] sm:$0xff]
      %v539 = vld [vmem:[%s8 + $0xa0] sm:$0xff]
      %v540 = vld [vmem:[%s8 + $0xa8] sm:$0xff]
      %v541 = vld [vmem:[%s8 + $0xb0] sm:$0xff]
      %v542 = vld [vmem:[%s8 + $0xb8] sm:$0xff]
      %v543 = vld [vmem:[%s8 + $0xc0] sm:$0xff]
      %v544 = vld [vmem:[%s8 + $0xc8] sm:$0xff]
      %v545 = vld [vmem:[%s8 + $0xd0] sm:$0xff]
      %v546 = vld [vmem:[%s8 + $0xd8] sm:$0xff]
      %v547 = vld [vmem:[%s8 + $0xe0] sm:$0xff]
      %v548 = vld [vmem:[%s8 + $0xe8] sm:$0xff]
      %v549 = vld [vmem:[%s8 + $0xf0] sm:$0xff]
      %v550 = vld [vmem:[%s8 + $0xf8] sm:$0xff]
      %v552 = vlaneseq
      %v553 = vshrl.u32 %v552, 7
      %v554 = vsub.s32 0, %v553
      %v555 = vrot.slane %v484, %v554
      %v556 = vlaneseq
      %v557 = vshrl.u32 %v556, 7
      %v558 = vsub.s32 2, %v557
      %v559 = vrot.slane %v484, %v558
      %v562 = vlaneseq
      %v563 = vshrl.u32 %v562, 7
      %v564 = vsub.s32 0, %v563
      %v565 = vrot.slane %v555, %v564
      %v566 = vlaneseq
      %v567 = vshrl.u32 %v566, 7
      %v568 = vsub.s32 0, %v567
      %v569 = vrot.slane %v559, %v568
      %v570 = vmul.f32 %v475, %v565
      %v571 = vmul.f32 %v476, %v569
      %v572 = vmul.f32 %v477, %v565
      %v573 = vmul.f32 %v478, %v569
      %574 = vmatprep.subr.mxu0 0.0
      %575 = vmatpush1.msra.mxu0 %v485
      %576 = vmatprep.subr.mxu0 0.0
      %577 = vmatpush1.msra.mxu0 %v486
      %578 = vmatprep.subr.mxu0 0.0
      %579 = vmatpush1.msra.mxu0 %v487
      %580 = vmatprep.subr.mxu0 0.0
      %581 = vmatpush1.msra.mxu0 %v488
      %582 = vmatprep.subr.mxu0 0.0
      %583 = vmatpush1.msra.mxu0 %v489
      %584 = vmatprep.subr.mxu0 0.0
      %585 = vmatpush1.msra.mxu0 %v490
      %586 = vmatprep.subr.mxu0 0.0
      %587 = vmatpush1.msra.mxu0 %v491
      %588 = vmatprep.subr.mxu0 0.0
      %589 = vmatpush1.msra.mxu0 %v492
      %590 = vmatprep.subr.mxu0 0.0
      %591 = vmatpush1.msra.mxu0 %v493
      %592 = vmatprep.subr.mxu0 0.0
      %593 = vmatpush1.msra.mxu0 %v494
      %594 = vmatprep.subr.mxu0 0.0
      %595 = vmatpush1.msra.mxu0 %v495
      %596 = vmatprep.subr.mxu0 0.0
      %597 = vmatpush1.msra.mxu0 %v496
      %598 = vmatprep.subr.mxu0 0.0
      %599 = vmatpush1.msra.mxu0 %v497
      %600 = vmatprep.subr.mxu0 0.0
      %601 = vmatpush1.msra.mxu0 %v498
      %602 = vmatprep.subr.mxu0 0.0
      %603 = vmatpush1.msra.mxu0 %v499
      %604 = vmatprep.subr.mxu0 0.0
      %605 = vmatpush1.msra.mxu0 %v500
      %606 = vmatprep.subr.mxu0 0.0
      %607 = vmatpush1.msra.mxu0 %v501
      %608 = vmatprep.subr.mxu0 0.0
      %609 = vmatpush1.msra.mxu0 %v502
      %610 = vmatprep.subr.mxu0 0.0
      %611 = vmatpush1.msra.mxu0 %v503
      %612 = vmatprep.subr.mxu0 0.0
      %613 = vmatpush1.msra.mxu0 %v504
      %614 = vmatprep.subr.mxu0 0.0
      %615 = vmatpush1.msra.mxu0 %v505
      %616 = vmatprep.subr.mxu0 0.0
      %617 = vmatpush1.msra.mxu0 %v506
      %618 = vmatprep.subr.mxu0 0.0
      %619 = vmatpush1.msra.mxu0 %v507
      %620 = vmatprep.subr.mxu0 0.0
      %621 = vmatpush1.msra.mxu0 %v508
      %622 = vmatprep.subr.mxu0 0.0
      %623 = vmatpush1.msra.mxu0 %v509
      %624 = vmatprep.subr.mxu0 0.0
      %625 = vmatpush1.msra.mxu0 %v510
      %626 = vmatprep.subr.mxu0 0.0
      %627 = vmatpush1.msra.mxu0 %v511
      %628 = vmatprep.subr.mxu0 0.0
      %629 = vmatpush1.msra.mxu0 %v512
      %630 = vmatprep.subr.mxu0 0.0
      %631 = vmatpush1.msra.mxu0 %v513
      %632 = vmatprep.subr.mxu0 0.0
      %633 = vmatpush1.msra.mxu0 %v514
      %634 = vmatprep.subr.mxu0 0.0
      %635 = vmatpush1.msra.mxu0 %v515
      %636 = vmatprep.subr.mxu0 0.0
      %637 = vmatpush1.msra.mxu0 %v516
      %638 = vmatprep.mubr.f32.mxu0 %v571
      %639 = vmatmul.mubr.f32.gmra.mrb[0].mxu0 %v570
      %v640 = vpop.f32.mrb[0].mxu0
      %v641 = vadd.f32 0.0, %v640
      %v642 = vpop.f32.mrb[0].mxu0
      %643 = vmatprep.mubr.f32.mxu0 %v573
      %644 = vmatmul.mubr.f32.gmra.mrb[0].mxu0 %v572
      %v645 = vpop.f32.mrb[0].mxu0
      %v646 = vadd.f32 0.0, %v645
      %v647 = vpop.f32.mrb[0].mxu0
      %648 = vdwg.mxu0
      %v649 = vmul.f32 %v641, 0.03125
      %v650 = vmul.f32 %v646, 0.03125
      %vm651 = vcmask 64512
      %v652 = vsel %vm651, %v649, -inf
      %653 = vmax.xlane.f32.xlu0 %v652
      %v654 = vpop.xlane.xlu0 %653
      %v655 = vsel %vm651, %v650, -inf
      %656 = vmax.xlane.f32.xlu0 %v655
      %v657 = vpop.xlane.xlu0 %656
      %v658 = vsub.f32 %v649, %v654
      %v659 = vsub.f32 %v650, %v657
      %v660 = vmul.f32 %v658, 1.442695
      %v661 = vpow.pop %v660
      %v662 = vmul.f32 %v659, 1.442695
      %v663 = vpow.pop %v662
      %v664 = vsel %vm651, %v661, 0.0
      %665 = vadd.xlane.f32.xlu0 %v664
      %v666 = vpop.xlane.xlu0 %665
      %v667 = vsel %vm651, %v663, 0.0
      %668 = vadd.xlane.f32.xlu0 %v667
      %v669 = vpop.xlane.xlu0 %668
      %v670 = vrcp.pop %v666
      %v671 = vrcp.pop %v669
      %v672 = vmul.f32 %v661, %v670
      %v673 = vmul.f32 %v663, %v671
      %v675 = vsel %vm651, %v672, 0
      %v678 = vsel %vm651, %v673, 0
      %680 = vmatprep.subr.mxu0 %v518
      %681 = vmatpush1.msra.mxu0 %v517
      %682 = vmatprep.subr.mxu0 0.0
      %683 = vmatpush1.msra.mxu0 0.0
      %684 = vmatprep.subr.mxu0 0.0
      %685 = vmatpush1.msra.mxu0 0.0
      %686 = vmatprep.subr.mxu0 0.0
      %687 = vmatpush1.msra.mxu0 0.0
      %688 = vmatprep.subr.mxu0 0.0
      %689 = vmatpush1.msra.mxu0 0.0
      %690 = vmatprep.subr.mxu0 0.0
      %691 = vmatpush1.msra.mxu0 0.0
      %692 = vmatprep.subr.mxu0 0.0
      %693 = vmatpush1.msra.mxu0 0.0
      %694 = vmatprep.subr.mxu0 0.0
      %695 = vmatpush1.msra.mxu0 0.0
      %696 = vmatprep.subr.mxu0 0.0
      %697 = vmatpush1.msra.mxu0 0.0
      %698 = vmatprep.subr.mxu0 0.0
      %699 = vmatpush1.msra.mxu0 0.0
      %700 = vmatprep.subr.mxu0 0.0
      %701 = vmatpush1.msra.mxu0 0.0
      %702 = vmatprep.subr.mxu0 0.0
      %703 = vmatpush1.msra.mxu0 0.0
      %704 = vmatprep.subr.mxu0 0.0
      %705 = vmatpush1.msra.mxu0 0.0
      %706 = vmatprep.subr.mxu0 0.0
      %707 = vmatpush1.msra.mxu0 0.0
      %708 = vmatprep.subr.mxu0 0.0
      %709 = vmatpush1.msra.mxu0 0.0
      %710 = vmatprep.subr.mxu0 0.0
      %711 = vmatpush1.msra.mxu0 0.0
      %712 = vmatprep.subr.mxu0 0.0
      %713 = vmatpush1.msra.mxu0 0.0
      %714 = vmatprep.subr.mxu0 0.0
      %715 = vmatpush1.msra.mxu0 0.0
      %716 = vmatprep.subr.mxu0 0.0
      %717 = vmatpush1.msra.mxu0 0.0
      %718 = vmatprep.subr.mxu0 0.0
      %719 = vmatpush1.msra.mxu0 0.0
      %720 = vmatprep.subr.mxu0 0.0
      %721 = vmatpush1.msra.mxu0 0.0
      %722 = vmatprep.subr.mxu0 0.0
      %723 = vmatpush1.msra.mxu0 0.0
      %724 = vmatprep.subr.mxu0 0.0
      %725 = vmatpush1.msra.mxu0 0.0
      %726 = vmatprep.subr.mxu0 0.0
      %727 = vmatpush1.msra.mxu0 0.0
      %728 = vmatprep.subr.mxu0 0.0
      %729 = vmatpush1.msra.mxu0 0.0
      %730 = vmatprep.subr.mxu0 0.0
      %731 = vmatpush1.msra.mxu0 0.0
      %732 = vmatprep.subr.mxu0 0.0
      %733 = vmatpush1.msra.mxu0 0.0
      %734 = vmatprep.subr.mxu0 0.0
      %735 = vmatpush1.msra.mxu0 0.0
      %736 = vmatprep.subr.mxu0 0.0
      %737 = vmatpush1.msra.mxu0 0.0
      %738 = vmatprep.subr.mxu0 0.0
      %739 = vmatpush1.msra.mxu0 0.0
      %740 = vmatprep.subr.mxu0 0.0
      %741 = vmatpush1.msra.mxu0 0.0
      %742 = vmatprep.subr.mxu0 0.0
      %743 = vmatpush1.msra.mxu0 0.0
      %744 = vmatprep.mubr.f32.mxu0 0.0
      %745 = vmatmul.mubr.f32.gmra.mrb[0].mxu0 %v675
      %v746 = vpop.f32.mrb[0].mxu0
      %v747 = vadd.f32 0.0, %v746
      %v748 = vpop.f32.mrb[0].mxu0
      %v749 = vadd.f32 0.0, %v748
      %750 = vmatprep.mubr.f32.mxu0 0.0
      %751 = vmatmul.mubr.f32.gmra.mrb[0].mxu0 %v678
      %v752 = vpop.f32.mrb[0].mxu0
      %v753 = vadd.f32 0.0, %v752
      %v754 = vpop.f32.mrb[0].mxu0
      %v755 = vadd.f32 0.0, %v754
      %756 = vdwg.mxu0
      %v757 = vmul.f32 %v747, %v469
      %v758 = vmul.f32 %v749, %v470
      %v759 = vmul.f32 %v753, %v471
      %v760 = vmul.f32 %v755, %v472
      %761 = vmatprep.subr.mxu0 0.0
      %762 = vmatpush1.msra.mxu0 %v519
      %763 = vmatprep.subr.mxu0 0.0
      %764 = vmatpush1.msra.mxu0 %v520
      %765 = vmatprep.subr.mxu0 0.0
      %766 = vmatpush1.msra.mxu0 %v521
      %767 = vmatprep.subr.mxu0 0.0
      %768 = vmatpush1.msra.mxu0 %v522
      %769 = vmatprep.subr.mxu0 0.0
      %770 = vmatpush1.msra.mxu0 %v523
      %771 = vmatprep.subr.mxu0 0.0
      %772 = vmatpush1.msra.mxu0 %v524
      %773 = vmatprep.subr.mxu0 0.0
      %774 = vmatpush1.msra.mxu0 %v525
      %775 = vmatprep.subr.mxu0 0.0
      %776 = vmatpush1.msra.mxu0 %v526
      %777 = vmatprep.subr.mxu0 0.0
      %778 = vmatpush1.msra.mxu0 %v527
      %779 = vmatprep.subr.mxu0 0.0
      %780 = vmatpush1.msra.mxu0 %v528
      %781 = vmatprep.subr.mxu0 0.0
      %782 = vmatpush1.msra.mxu0 %v529
      %783 = vmatprep.subr.mxu0 0.0
      %784 = vmatpush1.msra.mxu0 %v530
      %785 = vmatprep.subr.mxu0 0.0
      %786 = vmatpush1.msra.mxu0 %v531
      %787 = vmatprep.subr.mxu0 0.0
      %788 = vmatpush1.msra.mxu0 %v532
      %789 = vmatprep.subr.mxu0 0.0
      %790 = vmatpush1.msra.mxu0 %v533
      %791 = vmatprep.subr.mxu0 0.0
      %792 = vmatpush1.msra.mxu0 %v534
      %793 = vmatprep.subr.mxu0 0.0
      %794 = vmatpush1.msra.mxu0 %v535
      %795 = vmatprep.subr.mxu0 0.0
      %796 = vmatpush1.msra.mxu0 %v536
      %797 = vmatprep.subr.mxu0 0.0
      %798 = vmatpush1.msra.mxu0 %v537
      %799 = vmatprep.subr.mxu0 0.0
      %800 = vmatpush1.msra.mxu0 %v538
      %801 = vmatprep.subr.mxu0 0.0
      %802 = vmatpush1.msra.mxu0 %v539
      %803 = vmatprep.subr.mxu0 0.0
      %804 = vmatpush1.msra.mxu0 %v540
      %805 = vmatprep.subr.mxu0 0.0
      %806 = vmatpush1.msra.mxu0 %v541
      %807 = vmatprep.subr.mxu0 0.0
      %808 = vmatpush1.msra.mxu0 %v542
      %809 = vmatprep.subr.mxu0 0.0
      %810 = vmatpush1.msra.mxu0 %v543
      %811 = vmatprep.subr.mxu0 0.0
      %812 = vmatpush1.msra.mxu0 %v544
      %813 = vmatprep.subr.mxu0 0.0
      %814 = vmatpush1.msra.mxu0 %v545
      %815 = vmatprep.subr.mxu0 0.0
      %816 = vmatpush1.msra.mxu0 %v546
      %817 = vmatprep.subr.mxu0 0.0
      %818 = vmatpush1.msra.mxu0 %v547
      %819 = vmatprep.subr.mxu0 0.0
      %820 = vmatpush1.msra.mxu0 %v548
      %821 = vmatprep.subr.mxu0 0.0
      %822 = vmatpush1.msra.mxu0 %v549
      %823 = vmatprep.subr.mxu0 0.0
      %824 = vmatpush1.msra.mxu0 %v550
      %825 = vmatprep.mubr.f32.mxu0 %v758
      %826 = vmatmul.mubr.f32.gmra.mrb[0].mxu0 %v757
      %v827 = vpop.f32.mrb[0].mxu0
      %v828 = vadd.f32 0.0, %v827
      %v829 = vpop.f32.mrb[0].mxu0
      %830 = vmatprep.mubr.f32.mxu0 %v760
      %831 = vmatmul.mubr.f32.gmra.mrb[0].mxu0 %v759
      %v832 = vpop.f32.mrb[0].mxu0
      %v833 = vadd.f32 0.0, %v832
      %v834 = vpop.f32.mrb[0].mxu0
      %835 = vdwg.mxu0
      %v836 = vmul.f32 %v828, 0.125
      %v837 = vmul.f32 %v833, 0.125
      %v838 = vadd.f32 %v481, %v836
      %v839 = vadd.f32 %v482, %v837
      %v840 = vld [vmem:[%s4] sm:$0xff]
      %v841 = vld [vmem:[%s4 + $0x8] sm:$0xff]
      %v842 = vld [vmem:[%s4 + $0x10] sm:$0xff]
      %v843 = vld [vmem:[%s4 + $0x18] sm:$0xff]
      %v844 = vld [vmem:[%s5] sm:$0x1]
      %v846 = vlaneseq
      %v847 = vshrl.u32 %v846, 7
      %v848 = vsub.s32 0, %v847
      %v849 = vrot.slane %v844, %v848
      %vm851 = vcmask 261120
      %v853 = vsel %vm851, %v838, 0
      %v856 = vsel %vm851, %v839, 0
      %858 = vmatprep.subr.mxu0 0.0
      %859 = vmatpush1.msra.mxu0 %v840
      %860 = vmatprep.subr.mxu0 0.0
      %861 = vmatpush1.msra.mxu0 %v841
      %862 = vmatprep.subr.mxu0 0.0
      %863 = vmatpush1.msra.mxu0 %v842
      %864 = vmatprep.subr.mxu0 0.0
      %865 = vmatpush1.msra.mxu0 %v843
      %866 = vmatprep.subr.mxu0 0.0
      %867 = vmatpush1.msra.mxu0 0.0
      %868 = vmatprep.subr.mxu0 0.0
      %869 = vmatpush1.msra.mxu0 0.0
      %870 = vmatprep.subr.mxu0 0.0
      %871 = vmatpush1.msra.mxu0 0.0
      %872 = vmatprep.subr.mxu0 0.0
      %873 = vmatpush1.msra.mxu0 0.0
      %874 = vmatprep.subr.mxu0 0.0
      %875 = vmatpush1.msra.mxu0 0.0
      %876 = vmatprep.subr.mxu0 0.0
      %877 = vmatpush1.msra.mxu0 0.0
      %878 = vmatprep.subr.mxu0 0.0
      %879 = vmatpush1.msra.mxu0 0.0
      %880 = vmatprep.subr.mxu0 0.0
      %881 = vmatpush1.msra.mxu0 0.0
      %882 = vmatprep.subr.mxu0 0.0
      %883 = vmatpush1.msra.mxu0 0.0
      %884 = vmatprep.subr.mxu0 0.0
      %885 = vmatpush1.msra.mxu0 0.0
      %886 = vmatprep.subr.mxu0 0.0
      %887 = vmatpush1.msra.mxu0 0.0
      %888 = vmatprep.subr.mxu0 0.0
      %889 = vmatpush1.msra.mxu0 0.0
      %890 = vmatprep.subr.mxu0 0.0
      %891 = vmatpush1.msra.mxu0 0.0
      %892 = vmatprep.subr.mxu0 0.0
      %893 = vmatpush1.msra.mxu0 0.0
      %894 = vmatprep.subr.mxu0 0.0
      %895 = vmatpush1.msra.mxu0 0.0
      %896 = vmatprep.subr.mxu0 0.0
      %897 = vmatpush1.msra.mxu0 0.0
      %898 = vmatprep.subr.mxu0 0.0
      %899 = vmatpush1.msra.mxu0 0.0
      %900 = vmatprep.subr.mxu0 0.0
      %901 = vmatpush1.msra.mxu0 0.0
      %902 = vmatprep.subr.mxu0 0.0
      %903 = vmatpush1.msra.mxu0 0.0
      %904 = vmatprep.subr.mxu0 0.0
      %905 = vmatpush1.msra.mxu0 0.0
      %906 = vmatprep.subr.mxu0 0.0
      %907 = vmatpush1.msra.mxu0 0.0
      %908 = vmatprep.subr.mxu0 0.0
      %909 = vmatpush1.msra.mxu0 0.0
      %910 = vmatprep.subr.mxu0 0.0
      %911 = vmatpush1.msra.mxu0 0.0
      %912 = vmatprep.subr.mxu0 0.0
      %913 = vmatpush1.msra.mxu0 0.0
      %914 = vmatprep.subr.mxu0 0.0
      %915 = vmatpush1.msra.mxu0 0.0
      %916 = vmatprep.subr.mxu0 0.0
      %917 = vmatpush1.msra.mxu0 0.0
      %918 = vmatprep.subr.mxu0 0.0
      %919 = vmatpush1.msra.mxu0 0.0
      %920 = vmatprep.subr.mxu0 0.0
      %921 = vmatpush1.msra.mxu0 0.0
      %922 = vmatprep.mubr.f32.mxu0 0.0
      %923 = vmatmul.mubr.f32.gmra.mrb[0].mxu0 %v853
      %v924 = vpop.f32.mrb[0].mxu0
      %v925 = vadd.f32 %v849, %v924
      %v926 = vpop.f32.mrb[0].mxu0
      %927 = vmatprep.mubr.f32.mxu0 0.0
      %928 = vmatmul.mubr.f32.gmra.mrb[0].mxu0 %v856
      %v929 = vpop.f32.mrb[0].mxu0
      %v930 = vadd.f32 %v849, %v929
      %v931 = vpop.f32.mrb[0].mxu0
      %932 = vdwg.mxu0
      %v933 = vmax.f32 %v925, 0.0
      %v934 = vmax.f32 %v930, 0.0
      %v935 = vpack.c.bf16 %v934, %v933
      %v937 = vunpack.c.l.b16 %v935
      %v938 = vunpack.c.h.b16 %v935
      %v939 = vpack.c.b16 %v937, %v937
      %v940 = vpack.c.b16 %v938, %v938
      %vm943 = vcmask 257024
      %944 = vst.msk [vmem:[%s465] sm:$0xf] %vm943, %v939
      %945 = vst.msk [vmem:[%s465 + $0x4] sm:$0xf] %vm943, %v940
      %s946 = smul.u32 2, %s25
      %p947 = scmp.lt.s32.totalorder %s24, 1
      %s948 = scalar_select %p947, %s24, 1
      %p949 = scmp.lt.s32.totalorder %s946, 1
      %s950 = scalar_select %p949, %s946, 1
      %s951 = smul.addr %s948, 2
      %s952 = sadd.s32 %s950, %s951
      %s953 = smul.addr %s952, 4
      %s954 = scalar_lea.vmem %s9, %s953
      // Predicated region
      $region57: #{tpu_custom_call.1} parent=55 // pred_check
        %p955 = pneg %p267
      $region58: #{tpu_custom_call.1} parent=55 // pred_check_branch
        %957 = sbr.rel (%p955) target = $region60
      $region59: #{tpu_custom_call.1} parent=55 // pred_region
        %s958 = smul.u32 2, %s25
      $region60: #{tpu_custom_call.1} parent=55 // pred_fallthru
        _
    $region56: #{tpu_custom_call.1} parent=5 // pred_fallthru
      _
    %p959 = scmp.le.s32.totalorder 2, %s15
    // Predicated region
    $region61: #{tpu_custom_call.1} parent=5 // pred_check
      %p960 = pneg %p959
    $region62: #{tpu_custom_call.1} parent=5 // pred_check_branch
      %962 = sbr.rel (%p960) target = $region64
    $region63: #{tpu_custom_call.1} parent=5 // pred_region
      %s963 = ssub.s32 %s15, 2
      // Predicated region
      $region65: #{tpu_custom_call.1} parent=63 // pred_check
        %p964 = pneg %p273
      $region66: #{tpu_custom_call.1} parent=63 // pred_check_branch
        %966 = sbr.rel (%p964) target = $region68
      $region67: #{tpu_custom_call.1} parent=63 // pred_region
        %s967 = smul.u32 2, %s27
        %p968 = scmp.lt.s32.totalorder %s26, 1
        %s969 = scalar_select %p968, %s26, 1
        %p970 = scmp.lt.s32.totalorder %s967, 1
        %s971 = scalar_select %p970, %s967, 1
        %s972 = smul.addr %s969, 2
        %s973 = sadd.s32 %s971, %s972
        %s974 = smul.addr %s973, 4
        %s975 = scalar_lea.vmem %s9, %s974
      $region68: #{tpu_custom_call.1} parent=63 // pred_fallthru
        _
    $region64: #{tpu_custom_call.1} parent=5 // pred_fallthru
      _
  $region6: #{tpu_custom_call.1} parent=0 // loop_footer
    %s19 = sadd.s32 1, %s15
  $region7: #{tpu_custom_call.1} parent=0 // loop_footer_branch
    %14 = sbr.rel target = $region3
  $region8: #{tpu_custom_call.1} parent=0 // loop_exit
    _

</llo_original>
